<compile_context>
chip_gen: v7x
topology: tpu7x:2x2x1
jax: 0.10.0
libtpu: 0.0.40
codegen_flags: <defaults>
</compile_context>

<pallas_src>
import functools

import numpy as np
import jax
import jax.numpy as jnp
from jax.experimental import pallas as pl
from jax.experimental.pallas import tpu as pltpu


def _round_up(n, m):
    return ((n + m - 1) // m) * m


def _critic_kernel(sa_ref, wsa_ref, b1_ref, w2x_ref, b2_ref, w3_ref, b3_ref,
                   o_ref, *, h1p, compute_dtype):
    sa = sa_ref[...]                                        # (TB, sd+ad) bf16

    # Fused fc1 + fc2-action matmul: one MXU pass over the tiny K = sd+ad dim.
    # Column layout: [:h1p] = fc1 pre-activation, [h1p:] = action term of fc2.
    y = jnp.dot(sa, wsa_ref[...], preferred_element_type=jnp.float32)
    x_pre = y[:, :h1p]                                      # lane-aligned split
    a_term = y[:, h1p:]

    # fc1 bias + relu in f32 (padded columns stay exactly zero).
    x = jnp.maximum(x_pre + b1_ref[...], 0.0)

    # fc2 over the h1p-padded x; action contribution was computed above.
    h = jnp.dot(x.astype(compute_dtype), w2x_ref[...],
                preferred_element_type=jnp.float32)
    h = jnp.maximum(h + a_term + b2_ref[...], 0.0)

    # fc3 (out_features == 1): VPU multiply + lane reduction instead of an
    # N=1 MXU pass; bias is an SMEM scalar.
    o = jnp.sum(h * w3_ref[...], axis=-1, keepdims=True) + b3_ref[0]
    o_ref[...] = o.astype(o_ref.dtype)


def pack_critic_params(raw_params, state_dim, action_dim, *,
                       h1_pad_to=512, compute_dtype=jnp.bfloat16):
    """Convert natural-layout params into the kernel's packed/padded layout."""
    w1, b1, w2, b2, w3, b3 = raw_params
    h1 = w1.shape[1]
    h2 = w2.shape[1]
    sd, ad = state_dim, action_dim
    h1p = max(_round_up(h1, 128), h1_pad_to)

    # Fused (state|action) weight:
    #   cols [:h1p]  <- fc1 weight on the state rows (zero elsewhere)
    #   cols [h1p:]  <- action half of fc2 on the action rows (zero elsewhere)
    w_sa = jnp.zeros((sd + ad, h1p + h2), jnp.float32)
    w_sa = w_sa.at[:sd, :h1].set(w1)
    w_sa = w_sa.at[sd:, h1p:].set(w2[h1:])

    # fc1 bias padded to h1p (zeros in the pad -> relu(0) = 0 rows of w2x_p).
    b1p = jnp.zeros((1, h1p), jnp.float32).at[0, :h1].set(b1)

    # fc2 weight acting on x, zero-padded rows for the padded h1 columns.
    w2x_p = jnp.zeros((h1p, h2), jnp.float32).at[:h1].set(w2[:h1])

    return (w_sa.astype(compute_dtype),
            b1p,                                   # f32
            w2x_p.astype(compute_dtype),
            b2.reshape(1, h2).astype(jnp.float32),
            w3.reshape(1, h2).astype(jnp.float32),  # transposed fc3 weight row
            b3.reshape(1).astype(jnp.float32))      # 1-D SMEM scalar


def critic_forward(state, action, packed_params, *, batch_tile=512):
    """Batch-tiled Pallas forward.  Returns (B, 1) f32."""
    w_sa, b1p, w2x_p, b2, w3row, b3 = packed_params
    B, sd = state.shape
    ad = action.shape[1]
    h1p = b1p.shape[1]
    cdt = w_sa.dtype
    batch_tile = _round_up(max(batch_tile, 8), 8)

    # Pack [state | action] into one lane-dense bf16 activation slab.
    sa = jnp.concatenate([state.astype(jnp.float32),
                          action.astype(jnp.float32)], axis=1).astype(cdt)

    b8 = _round_up(B, 8)
    if b8 <= 512:
        # Typical DDPG batch: one grid step (the kernel is step-overhead /
        # latency bound at this size).
        tb = b8
    else:
        # Large batches: at least two balanced tiles so ("parallel",) lands
        # work on both TensorCores on v7x; cap at batch_tile.
        tb = min(batch_tile, _round_up((b8 + 1) // 2, 8))
    b_pad = _round_up(B, tb)
    if b_pad != B:
        sa = jnp.pad(sa, ((0, b_pad - B), (0, 0)))

    grid = (b_pad // tb,)

    def _resident(a):
        # Full-array block with a constant index map: fetched once, kept
        # resident in VMEM across all grid steps.
        return pl.BlockSpec(a.shape, lambda i: (0, 0))

    kernel = functools.partial(_critic_kernel, h1p=h1p, compute_dtype=cdt)

    out = pl.pallas_call(
        kernel,
        out_shape=jax.ShapeDtypeStruct((b_pad, 1), jnp.float32),
        grid=grid,
        in_specs=[
            pl.BlockSpec((tb, sd + ad), lambda i: (i, 0)),      # streamed
            _resident(w_sa), _resident(b1p), _resident(w2x_p),
            _resident(b2), _resident(w3row),
            pl.BlockSpec(memory_space=pltpu.MemorySpace.SMEM),  # b3 scalar
        ],
        out_specs=pl.BlockSpec((tb, 1), lambda i: (i, 0)),
        compiler_params=pltpu.CompilerParams(
            dimension_semantics=("parallel",)),     # megacore sharding on v7x
    )(sa, w_sa, b1p, w2x_p, b2, w3row, b3)

    return out[:B]


def init_critic_params(key, state_dim, action_dim, hidden=(400, 300),
                       init_w=3e-4):
    """Matches the PyTorch Critic init.

    fanin_init(weight.size()) on a torch Linear uses size[0] = out_features,
    so v = 1/sqrt(out_features).  Biases keep torch's default
    U(+-1/sqrt(in_features)).
    """
    h1, h2 = hidden
    kw1, kw2, kw3, kb1, kb2, kb3 = jax.random.split(key, 6)

    v1 = 1.0 / np.sqrt(h1)
    w1 = jax.random.uniform(kw1, (state_dim, h1), jnp.float32, -v1, v1)
    bb1 = 1.0 / np.sqrt(state_dim)
    b1 = jax.random.uniform(kb1, (h1,), jnp.float32, -bb1, bb1)

    v2 = 1.0 / np.sqrt(h2)
    w2 = jax.random.uniform(kw2, (h1 + action_dim, h2), jnp.float32, -v2, v2)
    bb2 = 1.0 / np.sqrt(h1 + action_dim)
    b2 = jax.random.uniform(kb2, (h2,), jnp.float32, -bb2, bb2)

    w3 = jax.random.uniform(kw3, (h2, 1), jnp.float32, -init_w, init_w)
    bb3 = 1.0 / np.sqrt(h2)
    b3 = jax.random.uniform(kb3, (1,), jnp.float32, -bb3, bb3)

    return (w1, b1, w2, b2, w3, b3)


def critic_reference(state, action, raw_params):
    """Pure-JAX f32 reference of the PyTorch forward (natural param layout)."""
    w1, b1, w2, b2, w3, b3 = raw_params
    x = jax.nn.relu(state @ w1 + b1)
    cat = jnp.concatenate([x, action], axis=1)
    h = jax.nn.relu(cat @ w2 + b2)
    return h @ w3 + b3


if __name__ == "__main__":
    STATE_DIM, ACTION_DIM = 16, 8
    HIDDEN = (400, 300)          # module default hidden=[400, 300]

    key = jax.random.PRNGKey(0)
    kp, ks, ka = jax.random.split(key, 3)

    raw_params = init_critic_params(kp, STATE_DIM, ACTION_DIM, HIDDEN)
    packed_params = pack_critic_params(raw_params, STATE_DIM, ACTION_DIM)

    # Test 1: small DDPG-style batch -> single grid step path.
    B1 = 40
    state1 = jax.random.normal(ks, (B1, STATE_DIM), jnp.float32)
    action1 = jax.random.normal(ka, (B1, ACTION_DIM), jnp.float32)
    out1 = critic_forward(state1, action1, packed_params)
    jax.block_until_ready(out1)
    ref1 = critic_reference(state1, action1, raw_params)
    np.testing.assert_allclose(np.asarray(out1), np.asarray(ref1),
                               rtol=2e-2, atol=2e-3)
    assert out1.shape == (B1, 1)

    # Test 2: larger batch -> two balanced tiles + batch padding path.
    B2 = 600
    ks2, ka2 = jax.random.split(jax.random.PRNGKey(1))
    state2 = jax.random.normal(ks2, (B2, STATE_DIM), jnp.float32)
    action2 = jax.random.normal(ka2, (B2, ACTION_DIM), jnp.float32)
    out2 = critic_forward(state2, action2, packed_params)
    jax.block_until_ready(out2)
    ref2 = critic_reference(state2, action2, raw_params)
    np.testing.assert_allclose(np.asarray(out2), np.asarray(ref2),
                               rtol=2e-2, atol=2e-3)
    assert out2.shape == (B2, 1)

    print("KERNEL_OK")
</pallas_src>

<mosaic_0001>
module attributes {stable_mosaic.version = 11 : i64} {
  func.func @_critic_kernel(%arg0: i32, %arg1: memref<40x24xbf16, #tpu.memory_space<vmem>>, %arg2: memref<24x812xbf16, #tpu.memory_space<vmem>>, %arg3: memref<1x512xf32, #tpu.memory_space<vmem>>, %arg4: memref<512x300xbf16, #tpu.memory_space<vmem>>, %arg5: memref<1x300xf32, #tpu.memory_space<vmem>>, %arg6: memref<1x300xf32, #tpu.memory_space<vmem>>, %arg7: memref<1xf32, #tpu.memory_space<smem>>, %arg8: memref<40x1xf32, #tpu.memory_space<vmem>>) attributes {dimension_semantics = [#tpu.dimension_semantics<parallel>], iteration_bounds = array<i64: 1>, scalar_prefetch = 0 : i64, scratch_operands = 0 : i64, tpu.core_type = #tpu.core_type<tc>, window_params = [{transform_indices = @transform_0, window_bounds = array<i64: 40, 24>}, {pipeline_mode = #tpu.pipeline_mode<synchronous>, transform_indices = @transform_1, window_bounds = array<i64: 24, 812>}, {pipeline_mode = #tpu.pipeline_mode<synchronous>, transform_indices = @transform_2, window_bounds = array<i64: 1, 512>}, {pipeline_mode = #tpu.pipeline_mode<synchronous>, transform_indices = @transform_3, window_bounds = array<i64: 512, 300>}, {pipeline_mode = #tpu.pipeline_mode<synchronous>, transform_indices = @transform_4, window_bounds = array<i64: 1, 300>}, {pipeline_mode = #tpu.pipeline_mode<synchronous>, transform_indices = @transform_5, window_bounds = array<i64: 1, 300>}, {transform_indices = @transform_6, window_bounds = array<i64: 1>}, {transform_indices = @transform_7, window_bounds = array<i64: 40, 1>}]} {
    %c0 = arith.constant 0 : index
    %c0_0 = arith.constant 0 : index
    %0 = vector.load %arg1[%c0, %c0_0] : memref<40x24xbf16, #tpu.memory_space<vmem>>, vector<40x24xbf16>
    %c0_1 = arith.constant 0 : index
    %c0_2 = arith.constant 0 : index
    %1 = vector.load %arg2[%c0_1, %c0_2] : memref<24x812xbf16, #tpu.memory_space<vmem>>, vector<24x812xbf16>
    %cst = arith.constant dense<0.000000e+00> : vector<40x812xf32>
    %2 = tpu.matmul %0, %1, %cst {dimension_numbers = #tpu.dot_dimension_numbers<[1], [0], [0], [1], [0, 0, 1, 1], [], []>} : vector<40x24xbf16>, vector<24x812xbf16>, vector<40x812xf32> -> vector<40x812xf32>
    %3 = vector.extract_strided_slice %2 {offsets = [0, 0], sizes = [40, 512], strides = [1, 1]} : vector<40x812xf32> to vector<40x512xf32>
    %4 = vector.extract_strided_slice %2 {offsets = [0, 512], sizes = [40, 300], strides = [1, 1]} : vector<40x812xf32> to vector<40x300xf32>
    %c0_3 = arith.constant 0 : index
    %c0_4 = arith.constant 0 : index
    %5 = vector.load %arg3[%c0_3, %c0_4] : memref<1x512xf32, #tpu.memory_space<vmem>>, vector<1x512xf32>
    %6 = vector.broadcast %5 : vector<1x512xf32> to vector<40x512xf32>
    %7 = arith.addf %3, %6 : vector<40x512xf32>
    %cst_5 = arith.constant 0.000000e+00 : f32
    %8 = vector.broadcast %cst_5 : f32 to vector<40x512xf32>
    %9 = arith.maximumf %7, %8 : vector<40x512xf32>
    %10 = arith.truncf %9 : vector<40x512xf32> to vector<40x512xbf16>
    %c0_6 = arith.constant 0 : index
    %c0_7 = arith.constant 0 : index
    %11 = vector.load %arg4[%c0_6, %c0_7] : memref<512x300xbf16, #tpu.memory_space<vmem>>, vector<512x300xbf16>
    %cst_8 = arith.constant dense<0.000000e+00> : vector<40x300xf32>
    %12 = tpu.matmul %10, %11, %cst_8 {dimension_numbers = #tpu.dot_dimension_numbers<[1], [0], [0], [1], [0, 0, 1, 1], [], []>} : vector<40x512xbf16>, vector<512x300xbf16>, vector<40x300xf32> -> vector<40x300xf32>
    %13 = arith.addf %12, %4 : vector<40x300xf32>
    %c0_9 = arith.constant 0 : index
    %c0_10 = arith.constant 0 : index
    %14 = vector.load %arg5[%c0_9, %c0_10] : memref<1x300xf32, #tpu.memory_space<vmem>>, vector<1x300xf32>
    %15 = vector.broadcast %14 : vector<1x300xf32> to vector<40x300xf32>
    %16 = arith.addf %13, %15 : vector<40x300xf32>
    %cst_11 = arith.constant 0.000000e+00 : f32
    %17 = vector.broadcast %cst_11 : f32 to vector<40x300xf32>
    %18 = arith.maximumf %16, %17 : vector<40x300xf32>
    %c0_12 = arith.constant 0 : index
    %c0_13 = arith.constant 0 : index
    %19 = vector.load %arg6[%c0_12, %c0_13] : memref<1x300xf32, #tpu.memory_space<vmem>>, vector<1x300xf32>
    %20 = vector.broadcast %19 : vector<1x300xf32> to vector<40x300xf32>
    %21 = arith.mulf %18, %20 : vector<40x300xf32>
    %cst_14 = arith.constant dense<0.000000e+00> : vector<40xf32>
    %22 = vector.multi_reduction <add>, %21, %cst_14 [1] : vector<40x300xf32> to vector<40xf32>
    %23 = vector.shape_cast %22 : vector<40xf32> to vector<40x1xf32>
    %c0_15 = arith.constant 0 : index
    %24 = memref.load %arg7[%c0_15] : memref<1xf32, #tpu.memory_space<smem>>
    %25 = vector.broadcast %24 : f32 to vector<40x1xf32>
    %26 = arith.addf %23, %25 : vector<40x1xf32>
    %c0_16 = arith.constant 0 : index
    %c0_17 = arith.constant 0 : index
    %27 = vector.load %arg8[%c0_16, %c0_17] : memref<40x1xf32, #tpu.memory_space<vmem>>, vector<40x1xf32>
    tpu.vector_store %arg8[%c0_16, %c0_17], %26 {strides = array<i32>} : memref<40x1xf32, #tpu.memory_space<vmem>>, vector<40x1xf32>,
    return
  }
  func.func @transform_0(%arg0: i32) -> (i32, i32) {
    %c0_i32 = arith.constant 0 : i32
    %c0_i32_0 = arith.constant 0 : i32
    return %arg0, %c0_i32 : i32, i32
  }
  func.func @transform_1(%arg0: i32) -> (i32, i32) {
    %c0_i32 = arith.constant 0 : i32
    %c0_i32_0 = arith.constant 0 : i32
    %c0_i32_1 = arith.constant 0 : i32
    return %c0_i32, %c0_i32_0 : i32, i32
  }
  func.func @transform_2(%arg0: i32) -> (i32, i32) {
    %c0_i32 = arith.constant 0 : i32
    %c0_i32_0 = arith.constant 0 : i32
    %c0_i32_1 = arith.constant 0 : i32
    return %c0_i32, %c0_i32_0 : i32, i32
  }
  func.func @transform_3(%arg0: i32) -> (i32, i32) {
    %c0_i32 = arith.constant 0 : i32
    %c0_i32_0 = arith.constant 0 : i32
    %c0_i32_1 = arith.constant 0 : i32
    return %c0_i32, %c0_i32_0 : i32, i32
  }
  func.func @transform_4(%arg0: i32) -> (i32, i32) {
    %c0_i32 = arith.constant 0 : i32
    %c0_i32_0 = arith.constant 0 : i32
    %c0_i32_1 = arith.constant 0 : i32
    return %c0_i32, %c0_i32_0 : i32, i32
  }
  func.func @transform_5(%arg0: i32) -> (i32, i32) {
    %c0_i32 = arith.constant 0 : i32
    %c0_i32_0 = arith.constant 0 : i32
    %c0_i32_1 = arith.constant 0 : i32
    return %c0_i32, %c0_i32_0 : i32, i32
  }
  func.func @transform_6(%arg0: i32) -> i32 {
    %c0_i32 = arith.constant 0 : i32
    %c0_i32_0 = arith.constant 0 : i32
    return %c0_i32 : i32
  }
  func.func @transform_7(%arg0: i32) -> (i32, i32) {
    %c0_i32 = arith.constant 0 : i32
    %c0_i32_0 = arith.constant 0 : i32
    return %arg0, %c0_i32 : i32, i32
  }
}

</mosaic_0001>

<llo_original>
// kernel: tpu_custom_call.1
$region0: #{tpu_custom_call.1}
  #allocation0 [shape = 'u32[]', space=smem, size = 0x4, offset = 0x4, fixed_abs, tag = 'smem constant byte address 0x4 - core index']
  #allocation1 [shape = 'u32[144,128]{1,0:T(1,128)}', space=vmem, size = 0x12000, scoped, tag = 'internal scratch']
  #allocation2 [shape = 'f32[1]{0:T(128)S(6)}', space=smem, size = 0x200, scoped, tag = 'scoped memory for tpu_custom_call.1']
  %s0 = inlined_call_operand.vmem [shape: bf16[40,24], index: 0, kind: input, shape index: {}]
  %s1 = inlined_call_operand.vmem [shape: bf16[24,812], index: 1, kind: input, shape index: {}]
  %s2 = inlined_call_operand.vmem [shape: f32[1,512], index: 2, kind: input, shape index: {}]
  %s3 = inlined_call_operand.vmem [shape: bf16[512,300], index: 3, kind: input, shape index: {}]
  %s4 = inlined_call_operand.vmem [shape: f32[1,300], index: 4, kind: input, shape index: {}]
  %s5 = inlined_call_operand.vmem [shape: f32[1,300], index: 5, kind: input, shape index: {}]
  %s6 = inlined_call_operand.<no memory space> [shape: f32[1], index: 6, kind: input, shape index: {}]
  %s7 = inlined_call_operand.vmem [shape: f32[40,1], index: 7, kind: output, shape index: {}]
  %s8 = sld [smem:[#allocation0]]
  $region38: #{tpu_custom_call.1} parent=0
    _
  %s10 = ssub.s32 1, %s8
  %s11 = scalar_select 0, %s10, %s8
  %12 = sst [smem:[#allocation2]] %s6
  // Predicated region
  $region2: #{tpu_custom_call.1} parent=0 // pred_check
    _
  $region3: #{tpu_custom_call.1} parent=0 // pred_check_branch
    %14 = sbr.rel (0) target = $region5
  $region4: #{tpu_custom_call.1} parent=0 // pred_region
    _
  $region5: #{tpu_custom_call.1} parent=0 // pred_fallthru
    _
  // Predicated region
  $region6: #{tpu_custom_call.1} parent=0 // pred_check
    _
  $region7: #{tpu_custom_call.1} parent=0 // pred_check_branch
    %16 = sbr.rel (0) target = $region9
  $region8: #{tpu_custom_call.1} parent=0 // pred_region
    _
  $region9: #{tpu_custom_call.1} parent=0 // pred_fallthru
    _
  // Predicated region
  $region10: #{tpu_custom_call.1} parent=0 // pred_check
    _
  $region11: #{tpu_custom_call.1} parent=0 // pred_check_branch
    %18 = sbr.rel (0) target = $region13
  $region12: #{tpu_custom_call.1} parent=0 // pred_region
    _
  $region13: #{tpu_custom_call.1} parent=0 // pred_fallthru
    _
  // Predicated region
  $region14: #{tpu_custom_call.1} parent=0 // pred_check
    _
  $region15: #{tpu_custom_call.1} parent=0 // pred_check_branch
    %20 = sbr.rel (0) target = $region17
  $region16: #{tpu_custom_call.1} parent=0 // pred_region
    _
  $region17: #{tpu_custom_call.1} parent=0 // pred_fallthru
    _
  // Predicated region
  $region18: #{tpu_custom_call.1} parent=0 // pred_check
    _
  $region19: #{tpu_custom_call.1} parent=0 // pred_check_branch
    %22 = sbr.rel (0) target = $region21
  $region20: #{tpu_custom_call.1} parent=0 // pred_region
    _
  $region21: #{tpu_custom_call.1} parent=0 // pred_fallthru
    _
  // Predicated region
  $region22: #{tpu_custom_call.1} parent=0 // pred_check
    _
  $region23: #{tpu_custom_call.1} parent=0 // pred_check_branch
    %24 = sbr.rel (0) target = $region25
  $region24: #{tpu_custom_call.1} parent=0 // pred_region
    _
  $region25: #{tpu_custom_call.1} parent=0 // pred_fallthru
    _
  // Predicated region
  $region26: #{tpu_custom_call.1} parent=0 // pred_check
    _
  $region27: #{tpu_custom_call.1} parent=0 // pred_check_branch
    %26 = sbr.rel (0) target = $region29
  $region28: #{tpu_custom_call.1} parent=0 // pred_region
    _
  $region29: #{tpu_custom_call.1} parent=0 // pred_fallthru
    _
  %v28 = vld [vmem:[%s0] sm:$0xf]
  %v29 = vld [vmem:[%s0 + $0x4] sm:$0xf]
  %v30 = vld [vmem:[%s0 + $0x8] sm:$0xf]
  %v31 = vld [vmem:[%s0 + $0xc] sm:$0xf]
  %v32 = vld [vmem:[%s0 + $0x10] sm:$0xf]
  %v33 = vld [vmem:[%s1] sm:$0xff]
  %v34 = vld [vmem:[%s1 + $0x8] sm:$0xff]
  %v35 = vld [vmem:[%s1 + $0x10] sm:$0xff]
  %v36 = vld [vmem:[%s1 + $0x18] sm:$0xf]
  %v37 = vld [vmem:[%s1 + $0x1c] sm:$0xff]
  %v38 = vld [vmem:[%s1 + $0x24] sm:$0xff]
  %v39 = vld [vmem:[%s1 + $0x2c] sm:$0xff]
  %v40 = vld [vmem:[%s1 + $0x34] sm:$0xf]
  %v41 = vld [vmem:[%s1 + $0x38] sm:$0xff]
  %v42 = vld [vmem:[%s1 + $0x40] sm:$0xff]
  %v43 = vld [vmem:[%s1 + $0x48] sm:$0xff]
  %v44 = vld [vmem:[%s1 + $0x50] sm:$0xf]
  %v50 = vunpack.c.l.b16 %v28
  %v51 = vunpack.c.l.b16 %v29
  %v52 = vunpack.c.l.b16 %v30
  %v53 = vunpack.c.l.b16 %v31
  %v54 = vunpack.c.l.b16 %v32
  %v55 = vpack.c.b16 %v51, %v50
  %v56 = vpack.c.b16 %v53, %v52
  %v57 = vpack.c.b16 %v54, %v54
  %v70 = vunpack.c.l.b16 %v33
  %v71 = vunpack.c.h.b16 %v33
  %v72 = vunpack.c.l.b16 %v34
  %v73 = vunpack.c.h.b16 %v34
  %v74 = vunpack.c.l.b16 %v35
  %v75 = vunpack.c.h.b16 %v35
  %v76 = vunpack.c.l.b16 %v36
  %v77 = vunpack.c.l.b16 %v37
  %v78 = vunpack.c.h.b16 %v37
  %v79 = vunpack.c.l.b16 %v38
  %v80 = vunpack.c.h.b16 %v38
  %v81 = vunpack.c.l.b16 %v39
  %v82 = vunpack.c.h.b16 %v39
  %v83 = vunpack.c.l.b16 %v40
  %v84 = vunpack.c.l.b16 %v41
  %v85 = vunpack.c.h.b16 %v41
  %v86 = vunpack.c.l.b16 %v42
  %v87 = vunpack.c.h.b16 %v42
  %v88 = vunpack.c.l.b16 %v43
  %v89 = vunpack.c.h.b16 %v43
  %v90 = vunpack.c.l.b16 %v44
  %v91 = vpack.c.b16 %v77, %v70
  %v92 = vpack.c.b16 %v78, %v71
  %v93 = vpack.c.b16 %v79, %v72
  %v94 = vpack.c.b16 %v80, %v73
  %v95 = vpack.c.b16 %v81, %v74
  %v96 = vpack.c.b16 %v82, %v75
  %v97 = vpack.c.b16 %v83, %v76
  %v98 = vpack.c.b16 %v84, %v84
  %v99 = vpack.c.b16 %v85, %v85
  %v100 = vpack.c.b16 %v86, %v86
  %v101 = vpack.c.b16 %v87, %v87
  %v102 = vpack.c.b16 %v88, %v88
  %v103 = vpack.c.b16 %v89, %v89
  %v104 = vpack.c.b16 %v90, %v90
  %vm112 = vcmask 195584
  %v114 = vsel %vm112, %v55, 0
  %v117 = vsel %vm112, %v56, 0
  %v120 = vsel %vm112, %v57, 0
  %vm122 = vcmask 1043456
  %v124 = vsel %vm122, %v98, 0
  %v127 = vsel %vm122, %v99, 0
  %v130 = vsel %vm122, %v100, 0
  %v133 = vsel %vm122, %v101, 0
  %v136 = vsel %vm122, %v102, 0
  %v139 = vsel %vm122, %v103, 0
  %v142 = vsel %vm122, %v104, 0
  %144 = vmatprep.subr.bf16.mxu0 %v92
  %145 = vmatpush1.bf16.msra.mxu0 %v91
  %146 = vmatprep.subr.bf16.mxu0 %v127
  %147 = vmatpush1.bf16.msra.mxu0 %v124
  %148 = vmatprep.subr.bf16.mxu0 0
  %149 = vmatpush1.bf16.msra.mxu0 0
  %150 = vmatprep.subr.bf16.mxu0 0
  %151 = vmatpush1.bf16.msra.mxu0 0
  %152 = vmatprep.subr.bf16.mxu0 0
  %153 = vmatpush1.bf16.msra.mxu0 0
  %154 = vmatprep.subr.bf16.mxu0 0
  %155 = vmatpush1.bf16.msra.mxu0 0
  %156 = vmatprep.subr.bf16.mxu0 0
  %157 = vmatpush1.bf16.msra.mxu0 0
  %158 = vmatprep.subr.bf16.mxu0 0
  %159 = vmatpush1.bf16.msra.mxu0 0
  %160 = vmatprep.subr.bf16.mxu0 0
  %161 = vmatpush1.bf16.msra.mxu0 0
  %162 = vmatprep.subr.bf16.mxu0 0
  %163 = vmatpush1.bf16.msra.mxu0 0
  %164 = vmatprep.subr.bf16.mxu0 0
  %165 = vmatpush1.bf16.msra.mxu0 0
  %166 = vmatprep.subr.bf16.mxu0 0
  %167 = vmatpush1.bf16.msra.mxu0 0
  %168 = vmatprep.subr.bf16.mxu0 0
  %169 = vmatpush1.bf16.msra.mxu0 0
  %170 = vmatprep.subr.bf16.mxu0 0
  %171 = vmatpush1.bf16.msra.mxu0 0
  %172 = vmatprep.subr.bf16.mxu0 0
  %173 = vmatpush1.bf16.msra.mxu0 0
  %174 = vmatprep.subr.bf16.mxu0 0
  %175 = vmatpush1.bf16.msra.mxu0 0
  %176 = vmatprep.mubr.bf16.mxu0 0
  %177 = vmatmul.mubr.bf16.gmra.mrb[0].mxu0 %v114
  %v178 = vpop.f32.mrb[0].mxu0
  %v179 = vadd.f32 0.0, %v178
  %v180 = vpop.f32.mrb[0].mxu0
  %v181 = vadd.f32 0.0, %v180
  %v182 = vpop.f32.mrb[0].mxu0
  %v183 = vadd.f32 0.0, %v182
  %v184 = vpop.f32.mrb[0].mxu0
  %v185 = vadd.f32 0.0, %v184
  %186 = vmatprep.mubr.bf16.mxu0 0
  %187 = vmatmul.mubr.bf16.gmra.mrb[0].mxu0 %v117
  %v188 = vpop.f32.mrb[0].mxu0
  %v189 = vadd.f32 0.0, %v188
  %v190 = vpop.f32.mrb[0].mxu0
  %v191 = vadd.f32 0.0, %v190
  %v192 = vpop.f32.mrb[0].mxu0
  %v193 = vadd.f32 0.0, %v192
  %v194 = vpop.f32.mrb[0].mxu0
  %v195 = vadd.f32 0.0, %v194
  %196 = vmatprep.mubr.bf16.mxu0 0
  %197 = vmatmul.mubr.bf16.gmra.mrb[0].mxu0 %v120
  %v198 = vpop.f32.mrb[0].mxu0
  %v199 = vadd.f32 0.0, %v198
  %v200 = vpop.f32.mrb[0].mxu0
  %v201 = vadd.f32 0.0, %v200
  %v202 = vpop.f32.mrb[0].mxu0
  %v203 = vpop.f32.mrb[0].mxu0
  %204 = vdwg.mxu0
  %205 = vmatprep.subr.bf16.mxu0 %v94
  %206 = vmatpush1.bf16.msra.mxu0 %v93
  %207 = vmatprep.subr.bf16.mxu0 %v133
  %208 = vmatpush1.bf16.msra.mxu0 %v130
  %209 = vmatprep.subr.bf16.mxu0 0
  %210 = vmatpush1.bf16.msra.mxu0 0
  %211 = vmatprep.subr.bf16.mxu0 0
  %212 = vmatpush1.bf16.msra.mxu0 0
  %213 = vmatprep.subr.bf16.mxu0 0
  %214 = vmatpush1.bf16.msra.mxu0 0
  %215 = vmatprep.subr.bf16.mxu0 0
  %216 = vmatpush1.bf16.msra.mxu0 0
  %217 = vmatprep.subr.bf16.mxu0 0
  %218 = vmatpush1.bf16.msra.mxu0 0
  %219 = vmatprep.subr.bf16.mxu0 0
  %220 = vmatpush1.bf16.msra.mxu0 0
  %221 = vmatprep.subr.bf16.mxu0 0
  %222 = vmatpush1.bf16.msra.mxu0 0
  %223 = vmatprep.subr.bf16.mxu0 0
  %224 = vmatpush1.bf16.msra.mxu0 0
  %225 = vmatprep.subr.bf16.mxu0 0
  %226 = vmatpush1.bf16.msra.mxu0 0
  %227 = vmatprep.subr.bf16.mxu0 0
  %228 = vmatpush1.bf16.msra.mxu0 0
  %229 = vmatprep.subr.bf16.mxu0 0
  %230 = vmatpush1.bf16.msra.mxu0 0
  %231 = vmatprep.subr.bf16.mxu0 0
  %232 = vmatpush1.bf16.msra.mxu0 0
  %233 = vmatprep.subr.bf16.mxu0 0
  %234 = vmatpush1.bf16.msra.mxu0 0
  %235 = vmatprep.subr.bf16.mxu0 0
  %236 = vmatpush1.bf16.msra.mxu0 0
  %237 = vmatprep.mubr.bf16.mxu0 0
  %238 = vmatmul.mubr.bf16.gmra.mrb[0].mxu0 %v114
  %v239 = vpop.f32.mrb[0].mxu0
  %v240 = vadd.f32 0.0, %v239
  %v241 = vpop.f32.mrb[0].mxu0
  %v242 = vadd.f32 0.0, %v241
  %v243 = vpop.f32.mrb[0].mxu0
  %v244 = vadd.f32 0.0, %v243
  %v245 = vpop.f32.mrb[0].mxu0
  %v246 = vadd.f32 0.0, %v245
  %247 = vmatprep.mubr.bf16.mxu0 0
  %248 = vmatmul.mubr.bf16.gmra.mrb[0].mxu0 %v117
  %v249 = vpop.f32.mrb[0].mxu0
  %v250 = vadd.f32 0.0, %v249
  %v251 = vpop.f32.mrb[0].mxu0
  %v252 = vadd.f32 0.0, %v251
  %v253 = vpop.f32.mrb[0].mxu0
  %v254 = vadd.f32 0.0, %v253
  %v255 = vpop.f32.mrb[0].mxu0
  %v256 = vadd.f32 0.0, %v255
  %257 = vmatprep.mubr.bf16.mxu0 0
  %258 = vmatmul.mubr.bf16.gmra.mrb[0].mxu0 %v120
  %v259 = vpop.f32.mrb[0].mxu0
  %v260 = vadd.f32 0.0, %v259
  %v261 = vpop.f32.mrb[0].mxu0
  %v262 = vadd.f32 0.0, %v261
  %v263 = vpop.f32.mrb[0].mxu0
  %v264 = vpop.f32.mrb[0].mxu0
  %265 = vdwg.mxu0
  %266 = vmatprep.subr.bf16.mxu0 %v96
  %267 = vmatpush1.bf16.msra.mxu0 %v95
  %268 = vmatprep.subr.bf16.mxu0 %v139
  %269 = vmatpush1.bf16.msra.mxu0 %v136
  %270 = vmatprep.subr.bf16.mxu0 0
  %271 = vmatpush1.bf16.msra.mxu0 0
  %272 = vmatprep.subr.bf16.mxu0 0
  %273 = vmatpush1.bf16.msra.mxu0 0
  %274 = vmatprep.subr.bf16.mxu0 0
  %275 = vmatpush1.bf16.msra.mxu0 0
  %276 = vmatprep.subr.bf16.mxu0 0
  %277 = vmatpush1.bf16.msra.mxu0 0
  %278 = vmatprep.subr.bf16.mxu0 0
  %279 = vmatpush1.bf16.msra.mxu0 0
  %280 = vmatprep.subr.bf16.mxu0 0
  %281 = vmatpush1.bf16.msra.mxu0 0
  %282 = vmatprep.subr.bf16.mxu0 0
  %283 = vmatpush1.bf16.msra.mxu0 0
  %284 = vmatprep.subr.bf16.mxu0 0
  %285 = vmatpush1.bf16.msra.mxu0 0
  %286 = vmatprep.subr.bf16.mxu0 0
  %287 = vmatpush1.bf16.msra.mxu0 0
  %288 = vmatprep.subr.bf16.mxu0 0
  %289 = vmatpush1.bf16.msra.mxu0 0
  %290 = vmatprep.subr.bf16.mxu0 0
  %291 = vmatpush1.bf16.msra.mxu0 0
  %292 = vmatprep.subr.bf16.mxu0 0
  %293 = vmatpush1.bf16.msra.mxu0 0
  %294 = vmatprep.subr.bf16.mxu0 0
  %295 = vmatpush1.bf16.msra.mxu0 0
  %296 = vmatprep.subr.bf16.mxu0 0
  %297 = vmatpush1.bf16.msra.mxu0 0
  %298 = vmatprep.mubr.bf16.mxu0 0
  %299 = vmatmul.mubr.bf16.gmra.mrb[0].mxu0 %v114
  %v300 = vpop.f32.mrb[0].mxu0
  %v301 = vadd.f32 0.0, %v300
  %v302 = vpop.f32.mrb[0].mxu0
  %v303 = vadd.f32 0.0, %v302
  %v304 = vpop.f32.mrb[0].mxu0
  %v305 = vadd.f32 0.0, %v304
  %v306 = vpop.f32.mrb[0].mxu0
  %v307 = vadd.f32 0.0, %v306
  %308 = vmatprep.mubr.bf16.mxu0 0
  %309 = vmatmul.mubr.bf16.gmra.mrb[0].mxu0 %v117
  %v310 = vpop.f32.mrb[0].mxu0
  %v311 = vadd.f32 0.0, %v310
  %v312 = vpop.f32.mrb[0].mxu0
  %v313 = vadd.f32 0.0, %v312
  %v314 = vpop.f32.mrb[0].mxu0
  %v315 = vadd.f32 0.0, %v314
  %v316 = vpop.f32.mrb[0].mxu0
  %v317 = vadd.f32 0.0, %v316
  %318 = vmatprep.mubr.bf16.mxu0 0
  %319 = vmatmul.mubr.bf16.gmra.mrb[0].mxu0 %v120
  %v320 = vpop.f32.mrb[0].mxu0
  %v321 = vadd.f32 0.0, %v320
  %v322 = vpop.f32.mrb[0].mxu0
  %v323 = vadd.f32 0.0, %v322
  %v324 = vpop.f32.mrb[0].mxu0
  %v325 = vpop.f32.mrb[0].mxu0
  %326 = vdwg.mxu0
  %327 = vmatprep.subr.bf16.mxu0 0
  %328 = vmatpush1.bf16.msra.mxu0 %v97
  %329 = vmatprep.subr.bf16.mxu0 0
  %330 = vmatpush1.bf16.msra.mxu0 %v142
  %331 = vmatprep.subr.bf16.mxu0 0
  %332 = vmatpush1.bf16.msra.mxu0 0
  %333 = vmatprep.subr.bf16.mxu0 0
  %334 = vmatpush1.bf16.msra.mxu0 0
  %335 = vmatprep.subr.bf16.mxu0 0
  %336 = vmatpush1.bf16.msra.mxu0 0
  %337 = vmatprep.subr.bf16.mxu0 0
  %338 = vmatpush1.bf16.msra.mxu0 0
  %339 = vmatprep.subr.bf16.mxu0 0
  %340 = vmatpush1.bf16.msra.mxu0 0
  %341 = vmatprep.subr.bf16.mxu0 0
  %342 = vmatpush1.bf16.msra.mxu0 0
  %343 = vmatprep.subr.bf16.mxu0 0
  %344 = vmatpush1.bf16.msra.mxu0 0
  %345 = vmatprep.subr.bf16.mxu0 0
  %346 = vmatpush1.bf16.msra.mxu0 0
  %347 = vmatprep.subr.bf16.mxu0 0
  %348 = vmatpush1.bf16.msra.mxu0 0
  %349 = vmatprep.subr.bf16.mxu0 0
  %350 = vmatpush1.bf16.msra.mxu0 0
  %351 = vmatprep.subr.bf16.mxu0 0
  %352 = vmatpush1.bf16.msra.mxu0 0
  %353 = vmatprep.subr.bf16.mxu0 0
  %354 = vmatpush1.bf16.msra.mxu0 0
  %355 = vmatprep.subr.bf16.mxu0 0
  %356 = vmatpush1.bf16.msra.mxu0 0
  %357 = vmatprep.subr.bf16.mxu0 0
  %358 = vmatpush1.bf16.msra.mxu0 0
  %359 = vmatprep.mubr.bf16.mxu0 0
  %360 = vmatmul.mubr.bf16.gmra.mrb[0].mxu0 %v114
  %v361 = vpop.f32.mrb[0].mxu0
  %v362 = vadd.f32 0.0, %v361
  %v363 = vpop.f32.mrb[0].mxu0
  %v364 = vpop.f32.mrb[0].mxu0
  %v365 = vadd.f32 0.0, %v364
  %v366 = vpop.f32.mrb[0].mxu0
  %367 = vmatprep.mubr.bf16.mxu0 0
  %368 = vmatmul.mubr.bf16.gmra.mrb[0].mxu0 %v117
  %v369 = vpop.f32.mrb[0].mxu0
  %v370 = vadd.f32 0.0, %v369
  %v371 = vpop.f32.mrb[0].mxu0
  %v372 = vpop.f32.mrb[0].mxu0
  %v373 = vadd.f32 0.0, %v372
  %v374 = vpop.f32.mrb[0].mxu0
  %375 = vmatprep.mubr.bf16.mxu0 0
  %376 = vmatmul.mubr.bf16.gmra.mrb[0].mxu0 %v120
  %v377 = vpop.f32.mrb[0].mxu0
  %v378 = vadd.f32 0.0, %v377
  %v379 = vpop.f32.mrb[0].mxu0
  %v380 = vpop.f32.mrb[0].mxu0
  %v381 = vpop.f32.mrb[0].mxu0
  %382 = vdwg.mxu0
  %v383 = vld [vmem:[%s2] sm:$0xf]
  %v385 = vlaneseq
  %v386 = vshrl.u32 %v385, 7
  %v387 = vsub.s32 0, %v386
  %v388 = vrot.slane %v383, %v387
  %v389 = vlaneseq
  %v390 = vshrl.u32 %v389, 7
  %v391 = vsub.s32 1, %v390
  %v392 = vrot.slane %v383, %v391
  %v393 = vlaneseq
  %v394 = vshrl.u32 %v393, 7
  %v395 = vsub.s32 2, %v394
  %v396 = vrot.slane %v383, %v395
  %v397 = vlaneseq
  %v398 = vshrl.u32 %v397, 7
  %v399 = vsub.s32 3, %v398
  %v400 = vrot.slane %v383, %v399
  %v405 = vadd.f32 %v179, %v388
  %v406 = vadd.f32 %v181, %v392
  %v407 = vadd.f32 %v240, %v396
  %v408 = vadd.f32 %v242, %v400
  %v409 = vadd.f32 %v183, %v388
  %v410 = vadd.f32 %v185, %v392
  %v411 = vadd.f32 %v244, %v396
  %v412 = vadd.f32 %v246, %v400
  %v413 = vadd.f32 %v189, %v388
  %v414 = vadd.f32 %v191, %v392
  %v415 = vadd.f32 %v250, %v396
  %v416 = vadd.f32 %v252, %v400
  %v417 = vadd.f32 %v193, %v388
  %v418 = vadd.f32 %v195, %v392
  %v419 = vadd.f32 %v254, %v396
  %v420 = vadd.f32 %v256, %v400
  %v421 = vadd.f32 %v199, %v388
  %v422 = vadd.f32 %v201, %v392
  %v423 = vadd.f32 %v260, %v396
  %v424 = vadd.f32 %v262, %v400
  %v425 = vmax.f32 %v405, 0.0
  %v426 = vmax.f32 %v406, 0.0
  %v427 = vmax.f32 %v407, 0.0
  %v428 = vmax.f32 %v408, 0.0
  %v429 = vmax.f32 %v409, 0.0
  %v430 = vmax.f32 %v410, 0.0
  %v431 = vmax.f32 %v411, 0.0
  %v432 = vmax.f32 %v412, 0.0
  %v433 = vmax.f32 %v413, 0.0
  %v434 = vmax.f32 %v414, 0.0
  %v435 = vmax.f32 %v415, 0.0
  %v436 = vmax.f32 %v416, 0.0
  %v437 = vmax.f32 %v417, 0.0
  %v438 = vmax.f32 %v418, 0.0
  %v439 = vmax.f32 %v419, 0.0
  %v440 = vmax.f32 %v420, 0.0
  %v441 = vmax.f32 %v421, 0.0
  %v442 = vmax.f32 %v422, 0.0
  %v443 = vmax.f32 %v423, 0.0
  %v444 = vmax.f32 %v424, 0.0
  %v445 = vpack.c.bf16 %v429, %v425
  %v446 = vpack.c.bf16 %v430, %v426
  %v447 = vpack.c.bf16 %v431, %v427
  %v448 = vpack.c.bf16 %v432, %v428
  %v449 = vpack.c.bf16 %v437, %v433
  %v450 = vpack.c.bf16 %v438, %v434
  %v451 = vpack.c.bf16 %v439, %v435
  %v452 = vpack.c.bf16 %v440, %v436
  %v453 = vpack.c.bf16 %v441, %v441
  %v454 = vpack.c.bf16 %v442, %v442
  %v455 = vpack.c.bf16 %v443, %v443
  %v456 = vpack.c.bf16 %v444, %v444
  %v457 = vld [vmem:[%s3] sm:$0xff]
  %v458 = vld [vmem:[%s3 + $0x8] sm:$0xf]
  %v459 = vld [vmem:[%s3 + $0xc] sm:$0xff]
  %v460 = vld [vmem:[%s3 + $0x14] sm:$0xf]
  %v461 = vld [vmem:[%s3 + $0x18] sm:$0xff]
  %v462 = vld [vmem:[%s3 + $0x20] sm:$0xf]
  %v463 = vld [vmem:[%s3 + $0x24] sm:$0xff]
  %v464 = vld [vmem:[%s3 + $0x2c] sm:$0xf]
  %v465 = vld [vmem:[%s3 + $0x30] sm:$0xff]
  %v466 = vld [vmem:[%s3 + $0x38] sm:$0xf]
  %v467 = vld [vmem:[%s3 + $0x3c] sm:$0xff]
  %v468 = vld [vmem:[%s3 + $0x44] sm:$0xf]
  %v469 = vld [vmem:[%s3 + $0x48] sm:$0xff]
  %v470 = vld [vmem:[%s3 + $0x50] sm:$0xf]
  %v471 = vld [vmem:[%s3 + $0x54] sm:$0xff]
  %v472 = vld [vmem:[%s3 + $0x5c] sm:$0xf]
  %v473 = vld [vmem:[%s3 + $0x60] sm:$0xff]
  %v474 = vld [vmem:[%s3 + $0x68] sm:$0xf]
  %v475 = vld [vmem:[%s3 + $0x6c] sm:$0xff]
  %v476 = vld [vmem:[%s3 + $0x74] sm:$0xf]
  %v477 = vld [vmem:[%s3 + $0x78] sm:$0xff]
  %v478 = vld [vmem:[%s3 + $0x80] sm:$0xf]
  %v479 = vld [vmem:[%s3 + $0x84] sm:$0xff]
  %v480 = vld [vmem:[%s3 + $0x8c] sm:$0xf]
  %v481 = vld [vmem:[%s3 + $0x90] sm:$0xff]
  %v482 = vld [vmem:[%s3 + $0x98] sm:$0xf]
  %v483 = vld [vmem:[%s3 + $0x9c] sm:$0xff]
  %v484 = vld [vmem:[%s3 + $0xa4] sm:$0xf]
  %v485 = vld [vmem:[%s3 + $0xa8] sm:$0xff]
  %v486 = vld [vmem:[%s3 + $0xb0] sm:$0xf]
  %v487 = vld [vmem:[%s3 + $0xb4] sm:$0xff]
  %v488 = vld [vmem:[%s3 + $0xbc] sm:$0xf]
  %v489 = vld [vmem:[%s3 + $0xc0] sm:$0xff]
  %v490 = vld [vmem:[%s3 + $0xc8] sm:$0xf]
  %v491 = vld [vmem:[%s3 + $0xcc] sm:$0xff]
  %v492 = vld [vmem:[%s3 + $0xd4] sm:$0xf]
  %v493 = vld [vmem:[%s3 + $0xd8] sm:$0xff]
  %v494 = vld [vmem:[%s3 + $0xe0] sm:$0xf]
  %v495 = vld [vmem:[%s3 + $0xe4] sm:$0xff]
  %v496 = vld [vmem:[%s3 + $0xec] sm:$0xf]
  %v497 = vld [vmem:[%s3 + $0xf0] sm:$0xff]
  %v498 = vld [vmem:[%s3 + $0xf8] sm:$0xf]
  %v499 = vld [vmem:[%s3 + $0xfc] sm:$0xff]
  %v500 = vld [vmem:[%s3 + $0x104] sm:$0xf]
  %v501 = vld [vmem:[%s3 + $0x108] sm:$0xff]
  %v502 = vld [vmem:[%s3 + $0x110] sm:$0xf]
  %v503 = vld [vmem:[%s3 + $0x114] sm:$0xff]
  %v504 = vld [vmem:[%s3 + $0x11c] sm:$0xf]
  %v505 = vld [vmem:[%s3 + $0x120] sm:$0xff]
  %v506 = vld [vmem:[%s3 + $0x128] sm:$0xf]
  %v507 = vld [vmem:[%s3 + $0x12c] sm:$0xff]
  %v508 = vld [vmem:[%s3 + $0x134] sm:$0xf]
  %v509 = vld [vmem:[%s3 + $0x138] sm:$0xff]
  %v510 = vld [vmem:[%s3 + $0x140] sm:$0xf]
  %v511 = vld [vmem:[%s3 + $0x144] sm:$0xff]
  %v512 = vld [vmem:[%s3 + $0x14c] sm:$0xf]
  %v513 = vld [vmem:[%s3 + $0x150] sm:$0xff]
  %v514 = vld [vmem:[%s3 + $0x158] sm:$0xf]
  %v515 = vld [vmem:[%s3 + $0x15c] sm:$0xff]
  %v516 = vld [vmem:[%s3 + $0x164] sm:$0xf]
  %v517 = vld [vmem:[%s3 + $0x168] sm:$0xff]
  %v518 = vld [vmem:[%s3 + $0x170] sm:$0xf]
  %v519 = vld [vmem:[%s3 + $0x174] sm:$0xff]
  %v520 = vld [vmem:[%s3 + $0x17c] sm:$0xf]
  %v521 = vld [vmem:[%s3 + $0x180] sm:$0xff]
  %v522 = vld [vmem:[%s3 + $0x188] sm:$0xf]
  %v523 = vld [vmem:[%s3 + $0x18c] sm:$0xff]
  %v524 = vld [vmem:[%s3 + $0x194] sm:$0xf]
  %v525 = vld [vmem:[%s3 + $0x198] sm:$0xff]
  %v526 = vld [vmem:[%s3 + $0x1a0] sm:$0xf]
  %v527 = vld [vmem:[%s3 + $0x1a4] sm:$0xff]
  %v528 = vld [vmem:[%s3 + $0x1ac] sm:$0xf]
  %v529 = vld [vmem:[%s3 + $0x1b0] sm:$0xff]
  %v530 = vld [vmem:[%s3 + $0x1b8] sm:$0xf]
  %v531 = vld [vmem:[%s3 + $0x1bc] sm:$0xff]
  %v532 = vld [vmem:[%s3 + $0x1c4] sm:$0xf]
  %v533 = vld [vmem:[%s3 + $0x1c8] sm:$0xff]
  %v534 = vld [vmem:[%s3 + $0x1d0] sm:$0xf]
  %v535 = vld [vmem:[%s3 + $0x1d4] sm:$0xff]
  %v536 = vld [vmem:[%s3 + $0x1dc] sm:$0xf]
  %v537 = vld [vmem:[%s3 + $0x1e0] sm:$0xff]
  %v538 = vld [vmem:[%s3 + $0x1e8] sm:$0xf]
  %v539 = vld [vmem:[%s3 + $0x1ec] sm:$0xff]
  %v540 = vld [vmem:[%s3 + $0x1f4] sm:$0xf]
  %v541 = vld [vmem:[%s3 + $0x1f8] sm:$0xff]
  %v542 = vld [vmem:[%s3 + $0x200] sm:$0xf]
  %v543 = vld [vmem:[%s3 + $0x204] sm:$0xff]
  %v544 = vld [vmem:[%s3 + $0x20c] sm:$0xf]
  %v545 = vld [vmem:[%s3 + $0x210] sm:$0xff]
  %v546 = vld [vmem:[%s3 + $0x218] sm:$0xf]
  %v547 = vld [vmem:[%s3 + $0x21c] sm:$0xff]
  %v548 = vld [vmem:[%s3 + $0x224] sm:$0xf]
  %v549 = vld [vmem:[%s3 + $0x228] sm:$0xff]
  %v550 = vld [vmem:[%s3 + $0x230] sm:$0xf]
  %v551 = vld [vmem:[%s3 + $0x234] sm:$0xff]
  %v552 = vld [vmem:[%s3 + $0x23c] sm:$0xf]
  %v553 = vld [vmem:[%s3 + $0x240] sm:$0xff]
  %v554 = vld [vmem:[%s3 + $0x248] sm:$0xf]
  %v555 = vld [vmem:[%s3 + $0x24c] sm:$0xff]
  %v556 = vld [vmem:[%s3 + $0x254] sm:$0xf]
  %v557 = vld [vmem:[%s3 + $0x258] sm:$0xff]
  %v558 = vld [vmem:[%s3 + $0x260] sm:$0xf]
  %v559 = vld [vmem:[%s3 + $0x264] sm:$0xff]
  %v560 = vld [vmem:[%s3 + $0x26c] sm:$0xf]
  %v561 = vld [vmem:[%s3 + $0x270] sm:$0xff]
  %v562 = vld [vmem:[%s3 + $0x278] sm:$0xf]
  %v563 = vld [vmem:[%s3 + $0x27c] sm:$0xff]
  %v564 = vld [vmem:[%s3 + $0x284] sm:$0xf]
  %v565 = vld [vmem:[%s3 + $0x288] sm:$0xff]
  %v566 = vld [vmem:[%s3 + $0x290] sm:$0xf]
  %v567 = vld [vmem:[%s3 + $0x294] sm:$0xff]
  %v568 = vld [vmem:[%s3 + $0x29c] sm:$0xf]
  %v569 = vld [vmem:[%s3 + $0x2a0] sm:$0xff]
  %v570 = vld [vmem:[%s3 + $0x2a8] sm:$0xf]
  %v571 = vld [vmem:[%s3 + $0x2ac] sm:$0xff]
  %v572 = vld [vmem:[%s3 + $0x2b4] sm:$0xf]
  %v573 = vld [vmem:[%s3 + $0x2b8] sm:$0xff]
  %v574 = vld [vmem:[%s3 + $0x2c0] sm:$0xf]
  %v575 = vld [vmem:[%s3 + $0x2c4] sm:$0xff]
  %v576 = vld [vmem:[%s3 + $0x2cc] sm:$0xf]
  %v577 = vld [vmem:[%s3 + $0x2d0] sm:$0xff]
  %v578 = vld [vmem:[%s3 + $0x2d8] sm:$0xf]
  %v579 = vld [vmem:[%s3 + $0x2dc] sm:$0xff]
  %v580 = vld [vmem:[%s3 + $0x2e4] sm:$0xf]
  %v581 = vld [vmem:[%s3 + $0x2e8] sm:$0xff]
  %v582 = vld [vmem:[%s3 + $0x2f0] sm:$0xf]
  %v583 = vld [vmem:[%s3 + $0x2f4] sm:$0xff]
  %v584 = vld [vmem:[%s3 + $0x2fc] sm:$0xf]
  %v713 = vunpack.c.l.b16 %v457
  %v714 = vunpack.c.h.b16 %v457
  %v715 = vunpack.c.l.b16 %v458
  %v716 = vunpack.c.l.b16 %v459
  %v717 = vunpack.c.h.b16 %v459
  %v718 = vunpack.c.l.b16 %v460
  %v719 = vunpack.c.l.b16 %v461
  %v720 = vunpack.c.h.b16 %v461
  %v721 = vunpack.c.l.b16 %v462
  %v722 = vunpack.c.l.b16 %v463
  %v723 = vunpack.c.h.b16 %v463
  %v724 = vunpack.c.l.b16 %v464
  %v725 = vunpack.c.l.b16 %v465
  %v726 = vunpack.c.h.b16 %v465
  %v727 = vunpack.c.l.b16 %v466
  %v728 = vunpack.c.l.b16 %v467
  %v729 = vunpack.c.h.b16 %v467
  %v730 = vunpack.c.l.b16 %v468
  %v731 = vunpack.c.l.b16 %v469
  %v732 = vunpack.c.h.b16 %v469
  %v733 = vunpack.c.l.b16 %v470
  %v734 = vunpack.c.l.b16 %v471
  %v735 = vunpack.c.h.b16 %v471
  %v736 = vunpack.c.l.b16 %v472
  %v737 = vunpack.c.l.b16 %v473
  %v738 = vunpack.c.h.b16 %v473
  %v739 = vunpack.c.l.b16 %v474
  %v740 = vunpack.c.l.b16 %v475
  %v741 = vunpack.c.h.b16 %v475
  %v742 = vunpack.c.l.b16 %v476
  %v743 = vunpack.c.l.b16 %v477
  %v744 = vunpack.c.h.b16 %v477
  %v745 = vunpack.c.l.b16 %v478
  %v746 = vunpack.c.l.b16 %v479
  %v747 = vunpack.c.h.b16 %v479
  %v748 = vunpack.c.l.b16 %v480
  %v749 = vunpack.c.l.b16 %v481
  %v750 = vunpack.c.h.b16 %v481
  %v751 = vunpack.c.l.b16 %v482
  %v752 = vunpack.c.l.b16 %v483
  %v753 = vunpack.c.h.b16 %v483
  %v754 = vunpack.c.l.b16 %v484
  %v755 = vunpack.c.l.b16 %v485
  %v756 = vunpack.c.h.b16 %v485
  %v757 = vunpack.c.l.b16 %v486
  %v758 = vunpack.c.l.b16 %v487
  %v759 = vunpack.c.h.b16 %v487
  %v760 = vunpack.c.l.b16 %v488
  %v761 = vunpack.c.l.b16 %v489
  %v762 = vunpack.c.h.b16 %v489
  %v763 = vunpack.c.l.b16 %v490
  %v764 = vunpack.c.l.b16 %v491
  %v765 = vunpack.c.h.b16 %v491
  %v766 = vunpack.c.l.b16 %v492
  %v767 = vunpack.c.l.b16 %v493
  %v768 = vunpack.c.h.b16 %v493
  %v769 = vunpack.c.l.b16 %v494
  %v770 = vunpack.c.l.b16 %v495
  %v771 = vunpack.c.h.b16 %v495
  %v772 = vunpack.c.l.b16 %v496
  %v773 = vunpack.c.l.b16 %v497
  %v774 = vunpack.c.h.b16 %v497
  %v775 = vunpack.c.l.b16 %v498
  %v776 = vunpack.c.l.b16 %v499
  %v777 = vunpack.c.h.b16 %v499
  %v778 = vunpack.c.l.b16 %v500
  %v779 = vunpack.c.l.b16 %v501
  %v780 = vunpack.c.h.b16 %v501
  %v781 = vunpack.c.l.b16 %v502
  %v782 = vunpack.c.l.b16 %v503
  %v783 = vunpack.c.h.b16 %v503
  %v784 = vunpack.c.l.b16 %v504
  %v785 = vunpack.c.l.b16 %v505
  %v786 = vunpack.c.h.b16 %v505
  %v787 = vunpack.c.l.b16 %v506
  %v788 = vunpack.c.l.b16 %v507
  %v789 = vunpack.c.h.b16 %v507
  %v790 = vunpack.c.l.b16 %v508
  %v791 = vunpack.c.l.b16 %v509
  %v792 = vunpack.c.h.b16 %v509
  %v793 = vunpack.c.l.b16 %v510
  %v794 = vunpack.c.l.b16 %v511
  %v795 = vunpack.c.h.b16 %v511
  %v796 = vunpack.c.l.b16 %v512
  %v797 = vunpack.c.l.b16 %v513
  %v798 = vunpack.c.h.b16 %v513
  %v799 = vunpack.c.l.b16 %v514
  %v800 = vunpack.c.l.b16 %v515
  %v801 = vunpack.c.h.b16 %v515
  %v802 = vunpack.c.l.b16 %v516
  %v803 = vunpack.c.l.b16 %v517
  %v804 = vunpack.c.h.b16 %v517
  %v805 = vunpack.c.l.b16 %v518
  %v806 = vunpack.c.l.b16 %v519
  %v807 = vunpack.c.h.b16 %v519
  %v808 = vunpack.c.l.b16 %v520
  %v809 = vunpack.c.l.b16 %v521
  %v810 = vunpack.c.h.b16 %v521
  %v811 = vunpack.c.l.b16 %v522
  %v812 = vunpack.c.l.b16 %v523
  %v813 = vunpack.c.h.b16 %v523
  %v814 = vunpack.c.l.b16 %v524
  %v815 = vunpack.c.l.b16 %v525
  %v816 = vunpack.c.h.b16 %v525
  %v817 = vunpack.c.l.b16 %v526
  %v818 = vunpack.c.l.b16 %v527
  %v819 = vunpack.c.h.b16 %v527
  %v820 = vunpack.c.l.b16 %v528
  %v821 = vunpack.c.l.b16 %v529
  %v822 = vunpack.c.h.b16 %v529
  %v823 = vunpack.c.l.b16 %v530
  %v824 = vunpack.c.l.b16 %v531
  %v825 = vunpack.c.h.b16 %v531
  %v826 = vunpack.c.l.b16 %v532
  %v827 = vunpack.c.l.b16 %v533
  %v828 = vunpack.c.h.b16 %v533
  %v829 = vunpack.c.l.b16 %v534
  %v830 = vunpack.c.l.b16 %v535
  %v831 = vunpack.c.h.b16 %v535
  %v832 = vunpack.c.l.b16 %v536
  %v833 = vunpack.c.l.b16 %v537
  %v834 = vunpack.c.h.b16 %v537
  %v835 = vunpack.c.l.b16 %v538
  %v836 = vunpack.c.l.b16 %v539
  %v837 = vunpack.c.h.b16 %v539
  %v838 = vunpack.c.l.b16 %v540
  %v839 = vunpack.c.l.b16 %v541
  %v840 = vunpack.c.h.b16 %v541
  %v841 = vunpack.c.l.b16 %v542
  %v842 = vunpack.c.l.b16 %v543
  %v843 = vunpack.c.h.b16 %v543
  %v844 = vunpack.c.l.b16 %v544
  %v845 = vunpack.c.l.b16 %v545
  %v846 = vunpack.c.h.b16 %v545
  %v847 = vunpack.c.l.b16 %v546
  %v848 = vunpack.c.l.b16 %v547
  %v849 = vunpack.c.h.b16 %v547
  %v850 = vunpack.c.l.b16 %v548
  %v851 = vunpack.c.l.b16 %v549
  %v852 = vunpack.c.h.b16 %v549
  %v853 = vunpack.c.l.b16 %v550
  %v854 = vunpack.c.l.b16 %v551
  %v855 = vunpack.c.h.b16 %v551
  %v856 = vunpack.c.l.b16 %v552
  %v857 = vunpack.c.l.b16 %v553
  %v858 = vunpack.c.h.b16 %v553
  %v859 = vunpack.c.l.b16 %v554
  %v860 = vunpack.c.l.b16 %v555
  %v861 = vunpack.c.h.b16 %v555
  %v862 = vunpack.c.l.b16 %v556
  %v863 = vunpack.c.l.b16 %v557
  %v864 = vunpack.c.h.b16 %v557
  %v865 = vunpack.c.l.b16 %v558
  %v866 = vunpack.c.l.b16 %v559
  %v867 = vunpack.c.h.b16 %v559
  %v868 = vunpack.c.l.b16 %v560
  %v869 = vunpack.c.l.b16 %v561
  %v870 = vunpack.c.h.b16 %v561
  %v871 = vunpack.c.l.b16 %v562
  %v872 = vunpack.c.l.b16 %v563
  %v873 = vunpack.c.h.b16 %v563
  %v874 = vunpack.c.l.b16 %v564
  %v875 = vunpack.c.l.b16 %v565
  %v876 = vunpack.c.h.b16 %v565
  %v877 = vunpack.c.l.b16 %v566
  %v878 = vunpack.c.l.b16 %v567
  %v879 = vunpack.c.h.b16 %v567
  %v880 = vunpack.c.l.b16 %v568
  %v881 = vunpack.c.l.b16 %v569
  %v882 = vunpack.c.h.b16 %v569
  %v883 = vunpack.c.l.b16 %v570
  %v884 = vunpack.c.l.b16 %v571
  %v885 = vunpack.c.h.b16 %v571
  %v886 = vunpack.c.l.b16 %v572
  %v887 = vunpack.c.l.b16 %v573
  %v888 = vunpack.c.h.b16 %v573
  %v889 = vunpack.c.l.b16 %v574
  %v890 = vunpack.c.l.b16 %v575
  %v891 = vunpack.c.h.b16 %v575
  %v892 = vunpack.c.l.b16 %v576
  %v893 = vunpack.c.l.b16 %v577
  %v894 = vunpack.c.h.b16 %v577
  %v895 = vunpack.c.l.b16 %v578
  %v896 = vunpack.c.l.b16 %v579
  %v897 = vunpack.c.h.b16 %v579
  %v898 = vunpack.c.l.b16 %v580
  %v899 = vunpack.c.l.b16 %v581
  %v900 = vunpack.c.h.b16 %v581
  %v901 = vunpack.c.l.b16 %v582
  %v902 = vunpack.c.l.b16 %v583
  %v903 = vunpack.c.h.b16 %v583
  %v904 = vunpack.c.l.b16 %v584
  %v905 = vpack.c.b16 %v716, %v713
  %v906 = vpack.c.b16 %v717, %v714
  %v907 = vpack.c.b16 %v718, %v715
  %v908 = vpack.c.b16 %v722, %v719
  %v909 = vpack.c.b16 %v723, %v720
  %v910 = vpack.c.b16 %v724, %v721
  %v911 = vpack.c.b16 %v728, %v725
  %v912 = vpack.c.b16 %v729, %v726
  %v913 = vpack.c.b16 %v730, %v727
  %v914 = vpack.c.b16 %v734, %v731
  %v915 = vpack.c.b16 %v735, %v732
  %v916 = vpack.c.b16 %v736, %v733
  %v917 = vpack.c.b16 %v740, %v737
  %v918 = vpack.c.b16 %v741, %v738
  %v919 = vpack.c.b16 %v742, %v739
  %v920 = vpack.c.b16 %v746, %v743
  %v921 = vpack.c.b16 %v747, %v744
  %v922 = vpack.c.b16 %v748, %v745
  %v923 = vpack.c.b16 %v752, %v749
  %v924 = vpack.c.b16 %v753, %v750
  %v925 = vpack.c.b16 %v754, %v751
  %v926 = vpack.c.b16 %v758, %v755
  %v927 = vpack.c.b16 %v759, %v756
  %v928 = vpack.c.b16 %v760, %v757
  %v929 = vpack.c.b16 %v764, %v761
  %v930 = vpack.c.b16 %v765, %v762
  %v931 = vpack.c.b16 %v766, %v763
  %v932 = vpack.c.b16 %v770, %v767
  %v933 = vpack.c.b16 %v771, %v768
  %v934 = vpack.c.b16 %v772, %v769
  %v935 = vpack.c.b16 %v776, %v773
  %v936 = vpack.c.b16 %v777, %v774
  %v937 = vpack.c.b16 %v778, %v775
  %v938 = vpack.c.b16 %v782, %v779
  %v939 = vpack.c.b16 %v783, %v780
  %v940 = vpack.c.b16 %v784, %v781
  %v941 = vpack.c.b16 %v788, %v785
  %v942 = vpack.c.b16 %v789, %v786
  %v943 = vpack.c.b16 %v790, %v787
  %v944 = vpack.c.b16 %v794, %v791
  %v945 = vpack.c.b16 %v795, %v792
  %v946 = vpack.c.b16 %v796, %v793
  %v947 = vpack.c.b16 %v800, %v797
  %v948 = vpack.c.b16 %v801, %v798
  %v949 = vpack.c.b16 %v802, %v799
  %v950 = vpack.c.b16 %v806, %v803
  %v951 = vpack.c.b16 %v807, %v804
  %v952 = vpack.c.b16 %v808, %v805
  %v953 = vpack.c.b16 %v812, %v809
  %v954 = vpack.c.b16 %v813, %v810
  %v955 = vpack.c.b16 %v814, %v811
  %v956 = vpack.c.b16 %v818, %v815
  %v957 = vpack.c.b16 %v819, %v816
  %v958 = vpack.c.b16 %v820, %v817
  %v959 = vpack.c.b16 %v824, %v821
  %v960 = vpack.c.b16 %v825, %v822
  %v961 = vpack.c.b16 %v826, %v823
  %v962 = vpack.c.b16 %v830, %v827
  %v963 = vpack.c.b16 %v831, %v828
  %v964 = vpack.c.b16 %v832, %v829
  %v965 = vpack.c.b16 %v836, %v833
  %v966 = vpack.c.b16 %v837, %v834
  %v967 = vpack.c.b16 %v838, %v835
  %v968 = vpack.c.b16 %v842, %v839
  %v969 = vpack.c.b16 %v843, %v840
  %v970 = vpack.c.b16 %v844, %v841
  %v971 = vpack.c.b16 %v848, %v845
  %v972 = vpack.c.b16 %v849, %v846
  %v973 = vpack.c.b16 %v850, %v847
  %v974 = vpack.c.b16 %v854, %v851
  %v975 = vpack.c.b16 %v855, %v852
  %v976 = vpack.c.b16 %v856, %v853
  %v977 = vpack.c.b16 %v860, %v857
  %v978 = vpack.c.b16 %v861, %v858
  %v979 = vpack.c.b16 %v862, %v859
  %v980 = vpack.c.b16 %v866, %v863
  %v981 = vpack.c.b16 %v867, %v864
  %v982 = vpack.c.b16 %v868, %v865
  %v983 = vpack.c.b16 %v872, %v869
  %v984 = vpack.c.b16 %v873, %v870
  %v985 = vpack.c.b16 %v874, %v871
  %v986 = vpack.c.b16 %v878, %v875
  %v987 = vpack.c.b16 %v879, %v876
  %v988 = vpack.c.b16 %v880, %v877
  %v989 = vpack.c.b16 %v884, %v881
  %v990 = vpack.c.b16 %v885, %v882
  %v991 = vpack.c.b16 %v886, %v883
  %v992 = vpack.c.b16 %v890, %v887
  %v993 = vpack.c.b16 %v891, %v888
  %v994 = vpack.c.b16 %v892, %v889
  %v995 = vpack.c.b16 %v896, %v893
  %v996 = vpack.c.b16 %v897, %v894
  %v997 = vpack.c.b16 %v898, %v895
  %v998 = vpack.c.b16 %v902, %v899
  %v999 = vpack.c.b16 %v903, %v900
  %v1000 = vpack.c.b16 %v904, %v901
  %1097 = vmatprep.subr.bf16.mxu0 %v906
  %1098 = vmatpush1.bf16.msra.mxu0 %v905
  %1099 = vmatprep.subr.bf16.mxu0 %v909
  %1100 = vmatpush1.bf16.msra.mxu0 %v908
  %1101 = vmatprep.subr.bf16.mxu0 %v912
  %1102 = vmatpush1.bf16.msra.mxu0 %v911
  %1103 = vmatprep.subr.bf16.mxu0 %v915
  %1104 = vmatpush1.bf16.msra.mxu0 %v914
  %1105 = vmatprep.subr.bf16.mxu0 %v918
  %1106 = vmatpush1.bf16.msra.mxu0 %v917
  %1107 = vmatprep.subr.bf16.mxu0 %v921
  %1108 = vmatpush1.bf16.msra.mxu0 %v920
  %1109 = vmatprep.subr.bf16.mxu0 %v924
  %1110 = vmatpush1.bf16.msra.mxu0 %v923
  %1111 = vmatprep.subr.bf16.mxu0 %v927
  %1112 = vmatpush1.bf16.msra.mxu0 %v926
  %1113 = vmatprep.subr.bf16.mxu0 %v930
  %1114 = vmatpush1.bf16.msra.mxu0 %v929
  %1115 = vmatprep.subr.bf16.mxu0 %v933
  %1116 = vmatpush1.bf16.msra.mxu0 %v932
  %1117 = vmatprep.subr.bf16.mxu0 %v936
  %1118 = vmatpush1.bf16.msra.mxu0 %v935
  %1119 = vmatprep.subr.bf16.mxu0 %v939
  %1120 = vmatpush1.bf16.msra.mxu0 %v938
  %1121 = vmatprep.subr.bf16.mxu0 %v942
  %1122 = vmatpush1.bf16.msra.mxu0 %v941
  %1123 = vmatprep.subr.bf16.mxu0 %v945
  %1124 = vmatpush1.bf16.msra.mxu0 %v944
  %1125 = vmatprep.subr.bf16.mxu0 %v948
  %1126 = vmatpush1.bf16.msra.mxu0 %v947
  %1127 = vmatprep.subr.bf16.mxu0 %v951
  %1128 = vmatpush1.bf16.msra.mxu0 %v950
  %1129 = vmatprep.mubr.bf16.mxu0 %v446
  %1130 = vmatmul.mubr.bf16.gmra.mrb[0].mxu0 %v445
  %v1131 = vpop.f32.mrb[0].mxu0
  %v1132 = vadd.f32 %v301, %v1131
  %v1133 = vpop.f32.mrb[0].mxu0
  %v1134 = vadd.f32 %v303, %v1133
  %v1135 = vpop.f32.mrb[0].mxu0
  %v1136 = vadd.f32 %v305, %v1135
  %v1137 = vpop.f32.mrb[0].mxu0
  %v1138 = vadd.f32 %v307, %v1137
  %1139 = vmatprep.mubr.bf16.mxu0 %v450
  %1140 = vmatmul.mubr.bf16.gmra.mrb[0].mxu0 %v449
  %v1141 = vpop.f32.mrb[0].mxu0
  %v1142 = vadd.f32 %v311, %v1141
  %v1143 = vpop.f32.mrb[0].mxu0
  %v1144 = vadd.f32 %v313, %v1143
  %v1145 = vpop.f32.mrb[0].mxu0
  %v1146 = vadd.f32 %v315, %v1145
  %v1147 = vpop.f32.mrb[0].mxu0
  %v1148 = vadd.f32 %v317, %v1147
  %1149 = vmatprep.mubr.bf16.mxu0 %v454
  %1150 = vmatmul.mubr.bf16.gmra.mrb[0].mxu0 %v453
  %v1151 = vpop.f32.mrb[0].mxu0
  %v1152 = vadd.f32 %v321, %v1151
  %v1153 = vpop.f32.mrb[0].mxu0
  %v1154 = vadd.f32 %v323, %v1153
  %v1155 = vpop.f32.mrb[0].mxu0
  %v1156 = vpop.f32.mrb[0].mxu0
  %1157 = vdwg.mxu0
  %1158 = vmatprep.subr.bf16.mxu0 %v954
  %1159 = vmatpush1.bf16.msra.mxu0 %v953
  %1160 = vmatprep.subr.bf16.mxu0 %v957
  %1161 = vmatpush1.bf16.msra.mxu0 %v956
  %1162 = vmatprep.subr.bf16.mxu0 %v960
  %1163 = vmatpush1.bf16.msra.mxu0 %v959
  %1164 = vmatprep.subr.bf16.mxu0 %v963
  %1165 = vmatpush1.bf16.msra.mxu0 %v962
  %1166 = vmatprep.subr.bf16.mxu0 %v966
  %1167 = vmatpush1.bf16.msra.mxu0 %v965
  %1168 = vmatprep.subr.bf16.mxu0 %v969
  %1169 = vmatpush1.bf16.msra.mxu0 %v968
  %1170 = vmatprep.subr.bf16.mxu0 %v972
  %1171 = vmatpush1.bf16.msra.mxu0 %v971
  %1172 = vmatprep.subr.bf16.mxu0 %v975
  %1173 = vmatpush1.bf16.msra.mxu0 %v974
  %1174 = vmatprep.subr.bf16.mxu0 %v978
  %1175 = vmatpush1.bf16.msra.mxu0 %v977
  %1176 = vmatprep.subr.bf16.mxu0 %v981
  %1177 = vmatpush1.bf16.msra.mxu0 %v980
  %1178 = vmatprep.subr.bf16.mxu0 %v984
  %1179 = vmatpush1.bf16.msra.mxu0 %v983
  %1180 = vmatprep.subr.bf16.mxu0 %v987
  %1181 = vmatpush1.bf16.msra.mxu0 %v986
  %1182 = vmatprep.subr.bf16.mxu0 %v990
  %1183 = vmatpush1.bf16.msra.mxu0 %v989
  %1184 = vmatprep.subr.bf16.mxu0 %v993
  %1185 = vmatpush1.bf16.msra.mxu0 %v992
  %1186 = vmatprep.subr.bf16.mxu0 %v996
  %1187 = vmatpush1.bf16.msra.mxu0 %v995
  %1188 = vmatprep.subr.bf16.mxu0 %v999
  %1189 = vmatpush1.bf16.msra.mxu0 %v998
  %1190 = vmatprep.mubr.bf16.mxu0 %v448
  %1191 = vmatmul.mubr.bf16.gmra.mrb[0].mxu0 %v447
  %v1192 = vpop.f32.mrb[0].mxu0
  %v1193 = vadd.f32 %v1132, %v1192
  %v1194 = vpop.f32.mrb[0].mxu0
  %v1195 = vadd.f32 %v1134, %v1194
  %v1196 = vpop.f32.mrb[0].mxu0
  %v1197 = vadd.f32 %v1136, %v1196
  %v1198 = vpop.f32.mrb[0].mxu0
  %v1199 = vadd.f32 %v1138, %v1198
  %1200 = vmatprep.mubr.bf16.mxu0 %v452
  %1201 = vmatmul.mubr.bf16.gmra.mrb[0].mxu0 %v451
  %v1202 = vpop.f32.mrb[0].mxu0
  %v1203 = vadd.f32 %v1142, %v1202
  %v1204 = vpop.f32.mrb[0].mxu0
  %v1205 = vadd.f32 %v1144, %v1204
  %v1206 = vpop.f32.mrb[0].mxu0
  %v1207 = vadd.f32 %v1146, %v1206
  %v1208 = vpop.f32.mrb[0].mxu0
  %v1209 = vadd.f32 %v1148, %v1208
  %1210 = vmatprep.mubr.bf16.mxu0 %v456
  %1211 = vmatmul.mubr.bf16.gmra.mrb[0].mxu0 %v455
  %v1212 = vpop.f32.mrb[0].mxu0
  %v1213 = vadd.f32 %v1152, %v1212
  %v1214 = vpop.f32.mrb[0].mxu0
  %v1215 = vadd.f32 %v1154, %v1214
  %v1216 = vpop.f32.mrb[0].mxu0
  %v1217 = vpop.f32.mrb[0].mxu0
  %1218 = vdwg.mxu0
  %1219 = vmatprep.subr.bf16.mxu0 0
  %1220 = vmatpush1.bf16.msra.mxu0 %v907
  %1221 = vmatprep.subr.bf16.mxu0 0
  %1222 = vmatpush1.bf16.msra.mxu0 %v910
  %1223 = vmatprep.subr.bf16.mxu0 0
  %1224 = vmatpush1.bf16.msra.mxu0 %v913
  %1225 = vmatprep.subr.bf16.mxu0 0
  %1226 = vmatpush1.bf16.msra.mxu0 %v916
  %1227 = vmatprep.subr.bf16.mxu0 0
  %1228 = vmatpush1.bf16.msra.mxu0 %v919
  %1229 = vmatprep.subr.bf16.mxu0 0
  %1230 = vmatpush1.bf16.msra.mxu0 %v922
  %1231 = vmatprep.subr.bf16.mxu0 0
  %1232 = vmatpush1.bf16.msra.mxu0 %v925
  %1233 = vmatprep.subr.bf16.mxu0 0
  %1234 = vmatpush1.bf16.msra.mxu0 %v928
  %1235 = vmatprep.subr.bf16.mxu0 0
  %1236 = vmatpush1.bf16.msra.mxu0 %v931
  %1237 = vmatprep.subr.bf16.mxu0 0
  %1238 = vmatpush1.bf16.msra.mxu0 %v934
  %1239 = vmatprep.subr.bf16.mxu0 0
  %1240 = vmatpush1.bf16.msra.mxu0 %v937
  %1241 = vmatprep.subr.bf16.mxu0 0
  %1242 = vmatpush1.bf16.msra.mxu0 %v940
  %1243 = vmatprep.subr.bf16.mxu0 0
  %1244 = vmatpush1.bf16.msra.mxu0 %v943
  %1245 = vmatprep.subr.bf16.mxu0 0
  %1246 = vmatpush1.bf16.msra.mxu0 %v946
  %1247 = vmatprep.subr.bf16.mxu0 0
  %1248 = vmatpush1.bf16.msra.mxu0 %v949
  %1249 = vmatprep.subr.bf16.mxu0 0
  %1250 = vmatpush1.bf16.msra.mxu0 %v952
  %1251 = vmatprep.mubr.bf16.mxu0 %v446
  %1252 = vmatmul.mubr.bf16.gmra.mrb[0].mxu0 %v445
  %v1253 = vpop.f32.mrb[0].mxu0
  %v1254 = vadd.f32 %v362, %v1253
  %v1255 = vpop.f32.mrb[0].mxu0
  %v1256 = vpop.f32.mrb[0].mxu0
  %v1257 = vadd.f32 %v365, %v1256
  %v1258 = vpop.f32.mrb[0].mxu0
  %1259 = vmatprep.mubr.bf16.mxu0 %v450
  %1260 = vmatmul.mubr.bf16.gmra.mrb[0].mxu0 %v449
  %v1261 = vpop.f32.mrb[0].mxu0
  %v1262 = vadd.f32 %v370, %v1261
  %v1263 = vpop.f32.mrb[0].mxu0
  %v1264 = vpop.f32.mrb[0].mxu0
  %v1265 = vadd.f32 %v373, %v1264
  %v1266 = vpop.f32.mrb[0].mxu0
  %1267 = vmatprep.mubr.bf16.mxu0 %v454
  %1268 = vmatmul.mubr.bf16.gmra.mrb[0].mxu0 %v453
  %v1269 = vpop.f32.mrb[0].mxu0
  %v1270 = vadd.f32 %v378, %v1269
  %v1271 = vpop.f32.mrb[0].mxu0
  %v1272 = vpop.f32.mrb[0].mxu0
  %v1273 = vpop.f32.mrb[0].mxu0
  %1274 = vdwg.mxu0
  %1275 = vmatprep.subr.bf16.mxu0 0
  %1276 = vmatpush1.bf16.msra.mxu0 %v955
  %1277 = vmatprep.subr.bf16.mxu0 0
  %1278 = vmatpush1.bf16.msra.mxu0 %v958
  %1279 = vmatprep.subr.bf16.mxu0 0
  %1280 = vmatpush1.bf16.msra.mxu0 %v961
  %1281 = vmatprep.subr.bf16.mxu0 0
  %1282 = vmatpush1.bf16.msra.mxu0 %v964
  %1283 = vmatprep.subr.bf16.mxu0 0
  %1284 = vmatpush1.bf16.msra.mxu0 %v967
  %1285 = vmatprep.subr.bf16.mxu0 0
  %1286 = vmatpush1.bf16.msra.mxu0 %v970
  %1287 = vmatprep.subr.bf16.mxu0 0
  %1288 = vmatpush1.bf16.msra.mxu0 %v973
  %1289 = vmatprep.subr.bf16.mxu0 0
  %1290 = vmatpush1.bf16.msra.mxu0 %v976
  %1291 = vmatprep.subr.bf16.mxu0 0
  %1292 = vmatpush1.bf16.msra.mxu0 %v979
  %1293 = vmatprep.subr.bf16.mxu0 0
  %1294 = vmatpush1.bf16.msra.mxu0 %v982
  %1295 = vmatprep.subr.bf16.mxu0 0
  %1296 = vmatpush1.bf16.msra.mxu0 %v985
  %1297 = vmatprep.subr.bf16.mxu0 0
  %1298 = vmatpush1.bf16.msra.mxu0 %v988
  %1299 = vmatprep.subr.bf16.mxu0 0
  %1300 = vmatpush1.bf16.msra.mxu0 %v991
  %1301 = vmatprep.subr.bf16.mxu0 0
  %1302 = vmatpush1.bf16.msra.mxu0 %v994
  %1303 = vmatprep.subr.bf16.mxu0 0
  %1304 = vmatpush1.bf16.msra.mxu0 %v997
  %1305 = vmatprep.subr.bf16.mxu0 0
  %1306 = vmatpush1.bf16.msra.mxu0 %v1000
  %1307 = vmatprep.mubr.bf16.mxu0 %v448
  %1308 = vmatmul.mubr.bf16.gmra.mrb[0].mxu0 %v447
  %v1309 = vpop.f32.mrb[0].mxu0
  %v1310 = vadd.f32 %v1254, %v1309
  %v1311 = vpop.f32.mrb[0].mxu0
  %v1312 = vpop.f32.mrb[0].mxu0
  %v1313 = vadd.f32 %v1257, %v1312
  %v1314 = vpop.f32.mrb[0].mxu0
  %1315 = vmatprep.mubr.bf16.mxu0 %v452
  %1316 = vmatmul.mubr.bf16.gmra.mrb[0].mxu0 %v451
  %v1317 = vpop.f32.mrb[0].mxu0
  %v1318 = vadd.f32 %v1262, %v1317
  %v1319 = vpop.f32.mrb[0].mxu0
  %v1320 = vpop.f32.mrb[0].mxu0
  %v1321 = vadd.f32 %v1265, %v1320
  %v1322 = vpop.f32.mrb[0].mxu0
  %1323 = vmatprep.mubr.bf16.mxu0 %v456
  %1324 = vmatmul.mubr.bf16.gmra.mrb[0].mxu0 %v455
  %v1325 = vpop.f32.mrb[0].mxu0
  %v1326 = vadd.f32 %v1270, %v1325
  %v1327 = vpop.f32.mrb[0].mxu0
  %v1328 = vpop.f32.mrb[0].mxu0
  %v1329 = vpop.f32.mrb[0].mxu0
  %1330 = vdwg.mxu0
  %v1331 = vld [vmem:[%s4] sm:$0x7]
  %v1333 = vlaneseq
  %v1334 = vshrl.u32 %v1333, 7
  %v1335 = vsub.s32 0, %v1334
  %v1336 = vrot.slane %v1331, %v1335
  %v1337 = vlaneseq
  %v1338 = vshrl.u32 %v1337, 7
  %v1339 = vsub.s32 1, %v1338
  %v1340 = vrot.slane %v1331, %v1339
  %v1341 = vlaneseq
  %v1342 = vshrl.u32 %v1341, 7
  %v1343 = vsub.s32 2, %v1342
  %v1344 = vrot.slane %v1331, %v1343
  %v1348 = vadd.f32 %v1193, %v1336
  %v1349 = vadd.f32 %v1195, %v1340
  %v1350 = vadd.f32 %v1310, %v1344
  %v1351 = vadd.f32 %v1197, %v1336
  %v1352 = vadd.f32 %v1199, %v1340
  %v1353 = vadd.f32 %v1313, %v1344
  %v1354 = vadd.f32 %v1203, %v1336
  %v1355 = vadd.f32 %v1205, %v1340
  %v1356 = vadd.f32 %v1318, %v1344
  %v1357 = vadd.f32 %v1207, %v1336
  %v1358 = vadd.f32 %v1209, %v1340
  %v1359 = vadd.f32 %v1321, %v1344
  %v1360 = vadd.f32 %v1213, %v1336
  %v1361 = vadd.f32 %v1215, %v1340
  %v1362 = vadd.f32 %v1326, %v1344
  %v1363 = vmax.f32 %v1348, 0.0
  %v1364 = vmax.f32 %v1349, 0.0
  %v1365 = vmax.f32 %v1350, 0.0
  %v1366 = vmax.f32 %v1351, 0.0
  %v1367 = vmax.f32 %v1352, 0.0
  %v1368 = vmax.f32 %v1353, 0.0
  %v1369 = vmax.f32 %v1354, 0.0
  %v1370 = vmax.f32 %v1355, 0.0
  %v1371 = vmax.f32 %v1356, 0.0
  %v1372 = vmax.f32 %v1357, 0.0
  %v1373 = vmax.f32 %v1358, 0.0
  %v1374 = vmax.f32 %v1359, 0.0
  %v1375 = vmax.f32 %v1360, 0.0
  %v1376 = vmax.f32 %v1361, 0.0
  %v1377 = vmax.f32 %v1362, 0.0
  %v1378 = vld [vmem:[%s5] sm:$0x7]
  %v1380 = vlaneseq
  %v1381 = vshrl.u32 %v1380, 7
  %v1382 = vsub.s32 0, %v1381
  %v1383 = vrot.slane %v1378, %v1382
  %v1384 = vlaneseq
  %v1385 = vshrl.u32 %v1384, 7
  %v1386 = vsub.s32 1, %v1385
  %v1387 = vrot.slane %v1378, %v1386
  %v1388 = vlaneseq
  %v1389 = vshrl.u32 %v1388, 7
  %v1390 = vsub.s32 2, %v1389
  %v1391 = vrot.slane %v1378, %v1390
  %v1395 = vmul.f32 %v1363, %v1383
  %v1396 = vmul.f32 %v1364, %v1387
  %v1397 = vmul.f32 %v1365, %v1391
  %v1398 = vmul.f32 %v1366, %v1383
  %v1399 = vmul.f32 %v1367, %v1387
  %v1400 = vmul.f32 %v1368, %v1391
  %v1401 = vmul.f32 %v1369, %v1383
  %v1402 = vmul.f32 %v1370, %v1387
  %v1403 = vmul.f32 %v1371, %v1391
  %v1404 = vmul.f32 %v1372, %v1383
  %v1405 = vmul.f32 %v1373, %v1387
  %v1406 = vmul.f32 %v1374, %v1391
  %v1407 = vmul.f32 %v1375, %v1383
  %v1408 = vmul.f32 %v1376, %v1387
  %v1409 = vmul.f32 %v1377, %v1391
  %v1410 = vadd.f32 %v1395, %v1396
  %vm1411 = vcmask 359424
  %v1412 = vsel %vm1411, %v1397, 0.0
  %v1413 = vadd.f32 %v1410, %v1412
  %1414 = vadd.xlane.f32.xlu0 %v1413
  %v1415 = vpop.xlane.xlu0 %1414
  %v1416 = vadd.f32 %v1398, %v1399
  %v1417 = vsel %vm1411, %v1400, 0.0
  %v1418 = vadd.f32 %v1416, %v1417
  %1419 = vadd.xlane.f32.xlu0 %v1418
  %v1420 = vpop.xlane.xlu0 %1419
  %v1421 = vadd.f32 %v1401, %v1402
  %v1422 = vsel %vm1411, %v1403, 0.0
  %v1423 = vadd.f32 %v1421, %v1422
  %1424 = vadd.xlane.f32.xlu0 %v1423
  %v1425 = vpop.xlane.xlu0 %1424
  %v1426 = vadd.f32 %v1404, %v1405
  %v1427 = vsel %vm1411, %v1406, 0.0
  %v1428 = vadd.f32 %v1426, %v1427
  %1429 = vadd.xlane.f32.xlu0 %v1428
  %v1430 = vpop.xlane.xlu0 %1429
  %v1431 = vadd.f32 %v1407, %v1408
  %v1432 = vsel %vm1411, %v1409, 0.0
  %v1433 = vadd.f32 %v1431, %v1432
  %1434 = vadd.xlane.f32.xlu0 %v1433
  %v1435 = vpop.xlane.xlu0 %1434
  %s1436 = sld [smem:[#allocation2]]
  %v1437 = vstv %s1436
  %v1438 = vadd.f32 %v1415, %v1437
  %v1439 = vadd.f32 %v1420, %v1437
  %v1440 = vadd.f32 %v1425, %v1437
  %v1441 = vadd.f32 %v1430, %v1437
  %v1442 = vadd.f32 %v1435, %v1437
  %vm1443 = vcmask 7168
  %1444 = vst.msk [vmem:[%s7] sm:$0xff] %vm1443, %v1438
  %1445 = vst.msk [vmem:[%s7 + $0x8] sm:$0xff] %vm1443, %v1439
  %1446 = vst.msk [vmem:[%s7 + $0x10] sm:$0xff] %vm1443, %v1440
  %1447 = vst.msk [vmem:[%s7 + $0x18] sm:$0xff] %vm1443, %v1441
  %1448 = vst.msk [vmem:[%s7 + $0x20] sm:$0xff] %vm1443, %v1442
  // Predicated region
  $region30: #{tpu_custom_call.1} parent=0 // pred_check
    _
  $region31: #{tpu_custom_call.1} parent=0 // pred_check_branch
    %1450 = sbr.rel (0) target = $region33
  $region32: #{tpu_custom_call.1} parent=0 // pred_region
    _
  $region33: #{tpu_custom_call.1} parent=0 // pred_fallthru
    _
  // Predicated region
  $region34: #{tpu_custom_call.1} parent=0 // pred_check
    _
  $region35: #{tpu_custom_call.1} parent=0 // pred_check_branch
    %1452 = sbr.rel (0) target = $region37
  $region36: #{tpu_custom_call.1} parent=0 // pred_region
    _
  $region37: #{tpu_custom_call.1} parent=0 // pred_fallthru
    _

</llo_original>
